<compile_context>
chip_gen: v7x
topology: tpu7x:2x2x1
jax: 0.10.0
libtpu: 0.0.40
codegen_flags: <defaults>
</compile_context>

<pallas_src>
import functools

import jax
import jax.numpy as jnp
from jax.experimental import pallas as pl
from jax.experimental.pallas import tpu as pltpu

EPS = 1e-6


# ---------------------------------------------------------------------------
# Kernels
# ---------------------------------------------------------------------------
def _ln_rowwise_kernel(x_ref, alpha_ref, beta_ref, o_ref, *, feat):
    """LayerNorm over the last dim; one (TILE_ROWS, F) tile per grid step."""
    x = x_ref[...].astype(jnp.float32)
    # Two-pass mean / unbiased variance (torch semantics: ddof=1, eps on std).
    mean = jnp.sum(x, axis=-1, keepdims=True) * (1.0 / feat)
    xc = x - mean
    var = jnp.sum(xc * xc, axis=-1, keepdims=True) * (1.0 / (feat - 1))
    var = jnp.maximum(var, 0.0)                    # guard sqrt(neg) from rounding
    denom = jnp.sqrt(var) + EPS
    inv = pl.reciprocal(denom, approx=True)        # EUP slot, essentially free
    inv = inv * (2.0 - denom * inv)                # one Newton step -> ~f32 acc.
    y = (alpha_ref[...].astype(jnp.float32) * (xc * inv)
         + beta_ref[...].astype(jnp.float32))
    o_ref[...] = y.astype(o_ref.dtype)


def _ln_segmented_kernel(x_ref, alpha_ref, beta_ref, m_ref, o_ref, *, feat):
    """Lane-dense LayerNorm with g = 128 // feat original rows folded per row.

    x_ref  : (TILE_ROWS, 128) -- each row holds g original rows of `feat` lanes
    m_ref  : (128, 128) block-diagonal ones; (x @ m) puts in every lane the sum
             over that lane's segment (the original row's sum), already
             broadcast back across the segment.  Runs on the idle MXU.
    """
    x = x_ref[...].astype(jnp.float32)
    m = m_ref[...]
    mean_b = jnp.dot(x, m, preferred_element_type=jnp.float32) * (1.0 / feat)
    xc = x - mean_b
    var_b = (jnp.dot(xc * xc, m, preferred_element_type=jnp.float32)
             * (1.0 / (feat - 1)))
    var_b = jnp.maximum(var_b, 0.0)
    denom = jnp.sqrt(var_b) + EPS
    inv = pl.reciprocal(denom, approx=True)
    inv = inv * (2.0 - denom * inv)
    y = (alpha_ref[...].astype(jnp.float32) * (xc * inv)
         + beta_ref[...].astype(jnp.float32))
    o_ref[...] = y.astype(o_ref.dtype)


# ---------------------------------------------------------------------------
# Tiling / VMEM policy (generation-aware)
# ---------------------------------------------------------------------------
def _vmem_budgets():
    """Returns (per-step tile budget, scoped-vmem-limit cap) in bytes."""
    try:
        cap = int(pltpu.get_tpu_info().vmem_capacity_bytes)
    except Exception:                               # conservative fallback
        cap = 64 * 1024 * 1024
    tile_budget = min(cap // 4, 32 * 1024 * 1024)   # 16 MiB v7x, 32 MiB v5e/v6e
    limit_cap = cap // 2                            # 32 MiB v7x, 64 MiB v5e/v6e
    return tile_budget, limit_cap


def _choose_tile_rows(rows, width, itemsize, tile_budget):
    """Largest sublane-aligned row tile under budget, keeping >= ~8 grid steps."""
    sublane = {4: 8, 2: 16, 1: 32}.get(itemsize, 8)
    # Per-row live VMEM: double-buffered in + out blocks plus ~4 f32 compute
    # temporaries (x, xc, product, y) in flight.
    per_row = width * (2 * itemsize + 2 * itemsize + 4 * 4)
    if rows <= sublane:
        return rows, per_row                        # single full-extent block
    t = int(tile_budget // max(per_row, 1))
    t = max(sublane, min(t, 1024))                  # 512-row tiles ~85% roofline
    if rows >= 8 * sublane:
        # Keep >= ~8 grid steps: gives the double-buffer something to overlap
        # and lets the "parallel" axis shard across v7x's two TensorCores.
        t = min(t, max(sublane, pl.cdiv(rows, 8)))
    t = (t // sublane) * sublane
    if t >= rows:
        return rows, per_row
    return t, per_row


# ---------------------------------------------------------------------------
# Decoder.forward wrapper
# ---------------------------------------------------------------------------
def decoder_forward(x, encoder_output, src_mask, tgt_mask, alpha, beta,
                    *, tile_rows=None, input_buffers=None):
    """Decoder.forward: (empty layer stack) -> LayerNormalization(x)."""
    del encoder_output, src_mask, tgt_mask          # unused: empty layer list
    B, S, F = x.shape
    assert F > 1, "unbiased std (ddof=1) requires features > 1"
    rows = B * S
    itemsize = jnp.dtype(x.dtype).itemsize

    # Lane-dense packing: fold g consecutive rows into the 128-lane dim when F
    # does not fill a vreg's lanes, so loads/stores are unmasked full-lane ops.
    fold = (F % 128 != 0) and (F < 128) and (128 % F == 0) \
        and (rows % (128 // F) == 0)
    g = (128 // F) if fold else 1
    W = g * F
    rows2 = rows // g

    x2 = x.reshape(rows2, W)                        # row-major: free reshape
    alpha2 = jnp.tile(alpha.reshape(1, F), (1, g))  # lane j -> alpha[j % F]
    beta2 = jnp.tile(beta.reshape(1, F), (1, g))

    tile_budget, limit_cap = _vmem_budgets()
    auto_tile, per_row = _choose_tile_rows(rows2, W, itemsize, tile_budget)
    if tile_rows is None:
        tile_rows = auto_tile
    tile_rows = max(1, min(tile_rows, rows2))

    param_bytes = 2 * (2 * W * 4) + (2 * W * W * 4 if fold else 0)
    needed = per_row * tile_rows + param_bytes
    vmem_limit = int(min(max(2 * needed, 32 * 1024 * 1024), limit_cap))

    grid = (pl.cdiv(rows2, tile_rows),)

    if input_buffers is not None and int(input_buffers) != 2:
        x_spec = pl.BlockSpec((tile_rows, W), lambda i: (i, 0),
                              pipeline_mode=pl.Buffered(int(input_buffers)))
    else:
        x_spec = pl.BlockSpec((tile_rows, W), lambda i: (i, 0))
    out_spec = pl.BlockSpec((tile_rows, W), lambda i: (i, 0))
    vec_spec = pl.BlockSpec((1, W), lambda i: (0, 0))

    if fold:
        flops = 4 * rows2 * W * W + 8 * rows * F
        transcendentals = 2 * rows2 * W
    else:
        flops = 8 * rows * F
        transcendentals = 2 * rows
    cost = pl.CostEstimate(
        flops=int(flops),
        transcendentals=int(transcendentals),
        bytes_accessed=int(2 * rows * F * itemsize + param_bytes),
    )
    compiler_params = pltpu.CompilerParams(
        dimension_semantics=("parallel",),          # shards across v7x's 2 TCs
        vmem_limit_bytes=vmem_limit,
    )

    if fold:
        seg = jnp.arange(W, dtype=jnp.int32) // F
        m_mat = (seg[:, None] == seg[None, :]).astype(jnp.float32)
        out = pl.pallas_call(
            functools.partial(_ln_segmented_kernel, feat=F),
            out_shape=jax.ShapeDtypeStruct((rows2, W), x.dtype),
            grid_spec=pltpu.PrefetchScalarGridSpec(
                num_scalar_prefetch=0,
                grid=grid,
                in_specs=[x_spec, vec_spec, vec_spec,
                          pl.BlockSpec((W, W), lambda i: (0, 0))],
                out_specs=out_spec,
            ),
            compiler_params=compiler_params,
            cost_estimate=cost,
        )(x2, alpha2, beta2, m_mat)
    else:
        out = pl.pallas_call(
            functools.partial(_ln_rowwise_kernel, feat=F),
            out_shape=jax.ShapeDtypeStruct((rows2, W), x.dtype),
            grid_spec=pltpu.PrefetchScalarGridSpec(
                num_scalar_prefetch=0,
                grid=grid,
                in_specs=[x_spec, vec_spec, vec_spec],
                out_specs=out_spec,
            ),
            compiler_params=compiler_params,
            cost_estimate=cost,
        )(x2, alpha2, beta2)

    return out.reshape(B, S, F)


def _reference(x, alpha, beta):
    xf = x.astype(jnp.float32)
    mean = jnp.mean(xf, axis=-1, keepdims=True)
    var = jnp.sum((xf - mean) ** 2, axis=-1, keepdims=True) / (xf.shape[-1] - 1)
    std = jnp.sqrt(var)
    return alpha * (xf - mean) / (std + EPS) + beta


if __name__ == "__main__":
    key = jax.random.PRNGKey(0)

    # Shapes implied by Decoder.forward: x / encoder_output (B, S, F), masks
    # broadcastable to (B, 1, S, S).  Small demo sizes.
    B, S, F = 2, 8, 32
    kx, ke = jax.random.split(key)
    x = jax.random.normal(kx, (B, S, F), dtype=jnp.float32)
    encoder_output = jax.random.normal(ke, (B, S, F), dtype=jnp.float32)
    src_mask = jnp.ones((B, 1, 1, S), dtype=jnp.float32)
    tgt_mask = jnp.tril(jnp.ones((S, S), dtype=jnp.float32))[None, None]
    alpha = jnp.ones((F,), dtype=jnp.float32)       # LayerNormalization init
    beta = jnp.zeros((F,), dtype=jnp.float32)

    y = decoder_forward(x, encoder_output, src_mask, tgt_mask, alpha, beta)
    y = jax.block_until_ready(y)
    assert y.shape == (B, S, F)
    y_ref = _reference(x, alpha, beta)
    assert jnp.max(jnp.abs(y - y_ref)) < 5e-4, "lane-dense (fold) path mismatch"

    # Also exercise the plain row-wise path (F a multiple of 128) with a
    # shifted mean to check the two-pass variance numerics.
    F2 = 128
    x_b = jax.random.normal(kx, (B, S, F2), dtype=jnp.float32) + 3.0
    alpha_b = jnp.ones((F2,), dtype=jnp.float32)
    beta_b = jnp.zeros((F2,), dtype=jnp.float32)
    y_b = decoder_forward(x_b, encoder_output, src_mask, tgt_mask, alpha_b, beta_b)
    y_b = jax.block_until_ready(y_b)
    assert jnp.max(jnp.abs(y_b - _reference(x_b, alpha_b, beta_b))) < 5e-4, \
        "row-wise path mismatch"

    print("KERNEL_OK")
</pallas_src>

<mosaic_0001>
module attributes {stable_mosaic.version = 11 : i64} {
  func.func @_ln_segmented_kernel(%arg0: i32, %arg1: memref<4x128xf32, #tpu.memory_space<vmem>>, %arg2: memref<1x128xf32, #tpu.memory_space<vmem>>, %arg3: memref<1x128xf32, #tpu.memory_space<vmem>>, %arg4: memref<128x128xf32, #tpu.memory_space<vmem>>, %arg5: memref<4x128xf32, #tpu.memory_space<vmem>>) attributes {dimension_semantics = [#tpu.dimension_semantics<parallel>], iteration_bounds = array<i64: 1>, scalar_prefetch = 0 : i64, scratch_operands = 0 : i64, tpu.core_type = #tpu.core_type<tc>, window_params = [{transform_indices = @transform_0, window_bounds = array<i64: 4, 128>}, {pipeline_mode = #tpu.pipeline_mode<synchronous>, transform_indices = @transform_1, window_bounds = array<i64: 1, 128>}, {pipeline_mode = #tpu.pipeline_mode<synchronous>, transform_indices = @transform_2, window_bounds = array<i64: 1, 128>}, {pipeline_mode = #tpu.pipeline_mode<synchronous>, transform_indices = @transform_3, window_bounds = array<i64: 128, 128>}, {transform_indices = @transform_4, window_bounds = array<i64: 4, 128>}]} {
    %c0 = arith.constant 0 : index
    %c0_0 = arith.constant 0 : index
    %0 = vector.load %arg1[%c0, %c0_0] : memref<4x128xf32, #tpu.memory_space<vmem>>, vector<4x128xf32>
    %c0_1 = arith.constant 0 : index
    %c0_2 = arith.constant 0 : index
    %1 = vector.load %arg4[%c0_1, %c0_2] : memref<128x128xf32, #tpu.memory_space<vmem>>, vector<128x128xf32>
    %cst = arith.constant dense<0.000000e+00> : vector<4x128xf32>
    %2 = tpu.matmul %0, %1, %cst {dimension_numbers = #tpu.dot_dimension_numbers<[1], [0], [0], [1], [0, 0, 1, 1], [], []>} : vector<4x128xf32>, vector<128x128xf32>, vector<4x128xf32> -> vector<4x128xf32>
    %cst_3 = arith.constant 3.125000e-02 : f32
    %3 = vector.broadcast %cst_3 : f32 to vector<4x128xf32>
    %4 = arith.mulf %2, %3 : vector<4x128xf32>
    %5 = arith.subf %0, %4 : vector<4x128xf32>
    %6 = arith.mulf %5, %5 : vector<4x128xf32>
    %cst_4 = arith.constant dense<0.000000e+00> : vector<4x128xf32>
    %7 = tpu.matmul %6, %1, %cst_4 {dimension_numbers = #tpu.dot_dimension_numbers<[1], [0], [0], [1], [0, 0, 1, 1], [], []>} : vector<4x128xf32>, vector<128x128xf32>, vector<4x128xf32> -> vector<4x128xf32>
    %cst_5 = arith.constant 0.0322580636 : f32
    %8 = vector.broadcast %cst_5 : f32 to vector<4x128xf32>
    %9 = arith.mulf %7, %8 : vector<4x128xf32>
    %cst_6 = arith.constant 0.000000e+00 : f32
    %10 = vector.broadcast %cst_6 : f32 to vector<4x128xf32>
    %11 = arith.maximumf %9, %10 : vector<4x128xf32>
    %12 = math.sqrt %11 : vector<4x128xf32>
    %cst_7 = arith.constant 9.99999997E-7 : f32
    %13 = vector.broadcast %cst_7 : f32 to vector<4x128xf32>
    %14 = arith.addf %12, %13 : vector<4x128xf32>
    %15 = tpu.reciprocal %14 {approx = true} : vector<4x128xf32> -> vector<4x128xf32>
    %16 = arith.mulf %14, %15 : vector<4x128xf32>
    %cst_8 = arith.constant 2.000000e+00 : f32
    %17 = vector.broadcast %cst_8 : f32 to vector<4x128xf32>
    %18 = arith.subf %17, %16 : vector<4x128xf32>
    %19 = arith.mulf %15, %18 : vector<4x128xf32>
    %c0_9 = arith.constant 0 : index
    %c0_10 = arith.constant 0 : index
    %20 = vector.load %arg2[%c0_9, %c0_10] : memref<1x128xf32, #tpu.memory_space<vmem>>, vector<1x128xf32>
    %21 = arith.mulf %5, %19 : vector<4x128xf32>
    %22 = vector.broadcast %20 : vector<1x128xf32> to vector<4x128xf32>
    %23 = arith.mulf %22, %21 : vector<4x128xf32>
    %c0_11 = arith.constant 0 : index
    %c0_12 = arith.constant 0 : index
    %24 = vector.load %arg3[%c0_11, %c0_12] : memref<1x128xf32, #tpu.memory_space<vmem>>, vector<1x128xf32>
    %25 = vector.broadcast %24 : vector<1x128xf32> to vector<4x128xf32>
    %26 = arith.addf %23, %25 : vector<4x128xf32>
    %c0_13 = arith.constant 0 : index
    %c0_14 = arith.constant 0 : index
    %27 = vector.load %arg5[%c0_13, %c0_14] : memref<4x128xf32, #tpu.memory_space<vmem>>, vector<4x128xf32>
    tpu.vector_store %arg5[%c0_13, %c0_14], %26 {strides = array<i32>} : memref<4x128xf32, #tpu.memory_space<vmem>>, vector<4x128xf32>,
    return
  }
  func.func @transform_0(%arg0: i32) -> (i32, i32) {
    %c0_i32 = arith.constant 0 : i32
    %c0_i32_0 = arith.constant 0 : i32
    return %arg0, %c0_i32 : i32, i32
  }
  func.func @transform_1(%arg0: i32) -> (i32, i32) {
    %c0_i32 = arith.constant 0 : i32
    %c0_i32_0 = arith.constant 0 : i32
    %c0_i32_1 = arith.constant 0 : i32
    return %c0_i32, %c0_i32_0 : i32, i32
  }
  func.func @transform_2(%arg0: i32) -> (i32, i32) {
    %c0_i32 = arith.constant 0 : i32
    %c0_i32_0 = arith.constant 0 : i32
    %c0_i32_1 = arith.constant 0 : i32
    return %c0_i32, %c0_i32_0 : i32, i32
  }
  func.func @transform_3(%arg0: i32) -> (i32, i32) {
    %c0_i32 = arith.constant 0 : i32
    %c0_i32_0 = arith.constant 0 : i32
    %c0_i32_1 = arith.constant 0 : i32
    return %c0_i32, %c0_i32_0 : i32, i32
  }
  func.func @transform_4(%arg0: i32) -> (i32, i32) {
    %c0_i32 = arith.constant 0 : i32
    %c0_i32_0 = arith.constant 0 : i32
    return %arg0, %c0_i32 : i32, i32
  }
}

</mosaic_0001>

<llo_original>
// kernel: tpu_custom_call.1
$region0: #{tpu_custom_call.1}
  #allocation0 [shape = 'u32[]', space=smem, size = 0x4, offset = 0x4, fixed_abs, tag = 'smem constant byte address 0x4 - core index']
  #allocation1 [shape = 'u32[144,128]{1,0:T(1,128)}', space=vmem, size = 0x12000, scoped, tag = 'internal scratch']
  %s0 = inlined_call_operand.hbm [shape: f32[4,128], index: 0, kind: input, shape index: {}]
  %s1 = inlined_call_operand.vmem [shape: f32[1,128], index: 1, kind: input, shape index: {}]
  %s2 = inlined_call_operand.vmem [shape: f32[1,128], index: 2, kind: input, shape index: {}]
  %s3 = inlined_call_operand.hbm [shape: f32[128,128], index: 3, kind: input, shape index: {}]
  %s4 = inlined_call_operand.hbm [shape: f32[4,128], index: 4, kind: output, shape index: {}]
  %s5 = sld [smem:[#allocation0]]
  $region34: #{tpu_custom_call.1} parent=0
    _
  %s7 = ssub.s32 1, %s5
  %s8 = scalar_select 0, %s7, %s5
  $region1: #{tpu_custom_call.1} parent=0
    #allocation2 [shape = 'u8[2048]{0}', space=vmem, size = 0x800, scoped, tag = 'input window, operand 0, single buffered']
    #allocation3 [shape = 's32[1]{0}', space=sflag, size = 0x4, scoped, tag = 'scoped memory for tpu_custom_call.1']
    #allocation4 [shape = 's32[1]{0}', space=sflag, size = 0x4, scoped, tag = 'scoped memory for tpu_custom_call.1']
    #allocation5 [shape = 'u8[65536]{0}', space=vmem, size = 0x10000, scoped, tag = 'input window, operand 3, single buffered']
    #allocation6 [shape = 's32[1]{0}', space=sflag, size = 0x4, scoped, tag = 'scoped memory for tpu_custom_call.1']
    #allocation7 [shape = 'u8[2048]{0}', space=vmem, size = 0x800, scoped, tag = 'output window, operand 0, single buffered']
    %9 = vsyncpa [#allocation3], 0
    %10 = vsyncpa [#allocation6], 0
    %11 = vsyncpa [#allocation4], 0
    // Predicated region
    $region2: #{tpu_custom_call.1} parent=1 // pred_check
      _
    $region3: #{tpu_custom_call.1} parent=1 // pred_check_branch
      %13 = sbr.rel (0) target = $region5
    $region4: #{tpu_custom_call.1} parent=1 // pred_region
      %s15 = ssub.s32 64, 64
      %16 = vsyncadd [#allocation3], %s15
      %s18 = sshll.u32 [#allocation2], 4
      %s19 = int_to_ptr.vmem [resolvable:$true] %s18
      %21 = dma.hbm_to_vmem [thread:$0]  %s0, 64, %s19, [#allocation3]
    $region5: #{tpu_custom_call.1} parent=1 // pred_fallthru
      _
    // Predicated region
    $region6: #{tpu_custom_call.1} parent=1 // pred_check
      _
    $region7: #{tpu_custom_call.1} parent=1 // pred_check_branch
      %23 = sbr.rel (0) target = $region9
    $region8: #{tpu_custom_call.1} parent=1 // pred_region
      _
    $region9: #{tpu_custom_call.1} parent=1 // pred_fallthru
      _
    // Predicated region
    $region10: #{tpu_custom_call.1} parent=1 // pred_check
      _
    $region11: #{tpu_custom_call.1} parent=1 // pred_check_branch
      %25 = sbr.rel (0) target = $region13
    $region12: #{tpu_custom_call.1} parent=1 // pred_region
      _
    $region13: #{tpu_custom_call.1} parent=1 // pred_fallthru
      _
    // Predicated region
    $region14: #{tpu_custom_call.1} parent=1 // pred_check
      _
    $region15: #{tpu_custom_call.1} parent=1 // pred_check_branch
      %27 = sbr.rel (0) target = $region17
    $region16: #{tpu_custom_call.1} parent=1 // pred_region
      %s29 = ssub.s32 2048, 2048
      %30 = vsyncadd [#allocation6], %s29
      %s31 = sshll.u32 [#allocation5], 4
      %s32 = int_to_ptr.vmem [resolvable:$true] %s31
      %37 = dma.hbm_to_vmem [thread:$0]  %s3, 2048, %s32, [#allocation6], 128, 128, 8
    $region17: #{tpu_custom_call.1} parent=1 // pred_fallthru
      _
    // Predicated region
    $region18: #{tpu_custom_call.1} parent=1 // pred_check
      _
    $region19: #{tpu_custom_call.1} parent=1 // pred_check_branch
      %39 = sbr.rel (0) target = $region21
    $region20: #{tpu_custom_call.1} parent=1 // pred_region
      %40 = dma.done [#allocation3], 64
    $region21: #{tpu_custom_call.1} parent=1 // pred_fallthru
      _
    // Predicated region
    $region22: #{tpu_custom_call.1} parent=1 // pred_check
      _
    $region23: #{tpu_custom_call.1} parent=1 // pred_check_branch
      %42 = sbr.rel (0) target = $region25
    $region24: #{tpu_custom_call.1} parent=1 // pred_region
      %43 = dma.done [#allocation6], 2048
    $region25: #{tpu_custom_call.1} parent=1 // pred_fallthru
      _
    %v44 = vld [vmem:[#allocation2] sm:$0xf]
    %v45 = vld [vmem:[#allocation5] sm:$0xff]
    %v46 = vld [vmem:[#allocation5 + $0x8] sm:$0xff]
    %v47 = vld [vmem:[#allocation5 + $0x10] sm:$0xff]
    %v48 = vld [vmem:[#allocation5 + $0x18] sm:$0xff]
    %v49 = vld [vmem:[#allocation5 + $0x20] sm:$0xff]
    %v50 = vld [vmem:[#allocation5 + $0x28] sm:$0xff]
    %v51 = vld [vmem:[#allocation5 + $0x30] sm:$0xff]
    %v52 = vld [vmem:[#allocation5 + $0x38] sm:$0xff]
    %v53 = vld [vmem:[#allocation5 + $0x40] sm:$0xff]
    %v54 = vld [vmem:[#allocation5 + $0x48] sm:$0xff]
    %v55 = vld [vmem:[#allocation5 + $0x50] sm:$0xff]
    %v56 = vld [vmem:[#allocation5 + $0x58] sm:$0xff]
    %v57 = vld [vmem:[#allocation5 + $0x60] sm:$0xff]
    %v58 = vld [vmem:[#allocation5 + $0x68] sm:$0xff]
    %v59 = vld [vmem:[#allocation5 + $0x70] sm:$0xff]
    %v60 = vld [vmem:[#allocation5 + $0x78] sm:$0xff]
    %61 = vmatprep.subr.mxu0 0.0
    %62 = vmatpush1.msra.mxu0 %v45
    %63 = vmatprep.subr.mxu0 0.0
    %64 = vmatpush1.msra.mxu0 %v46
    %65 = vmatprep.subr.mxu0 0.0
    %66 = vmatpush1.msra.mxu0 %v47
    %67 = vmatprep.subr.mxu0 0.0
    %68 = vmatpush1.msra.mxu0 %v48
    %69 = vmatprep.subr.mxu0 0.0
    %70 = vmatpush1.msra.mxu0 %v49
    %71 = vmatprep.subr.mxu0 0.0
    %72 = vmatpush1.msra.mxu0 %v50
    %73 = vmatprep.subr.mxu0 0.0
    %74 = vmatpush1.msra.mxu0 %v51
    %75 = vmatprep.subr.mxu0 0.0
    %76 = vmatpush1.msra.mxu0 %v52
    %77 = vmatprep.subr.mxu0 0.0
    %78 = vmatpush1.msra.mxu0 %v53
    %79 = vmatprep.subr.mxu0 0.0
    %80 = vmatpush1.msra.mxu0 %v54
    %81 = vmatprep.subr.mxu0 0.0
    %82 = vmatpush1.msra.mxu0 %v55
    %83 = vmatprep.subr.mxu0 0.0
    %84 = vmatpush1.msra.mxu0 %v56
    %85 = vmatprep.subr.mxu0 0.0
    %86 = vmatpush1.msra.mxu0 %v57
    %87 = vmatprep.subr.mxu0 0.0
    %88 = vmatpush1.msra.mxu0 %v58
    %89 = vmatprep.subr.mxu0 0.0
    %90 = vmatpush1.msra.mxu0 %v59
    %91 = vmatprep.subr.mxu0 0.0
    %92 = vmatpush1.msra.mxu0 %v60
    %93 = vmatprep.subr.mxu0 0.0
    %94 = vmatpush1.msra.mxu0 0.0
    %95 = vmatprep.subr.mxu0 0.0
    %96 = vmatpush1.msra.mxu0 0.0
    %97 = vmatprep.subr.mxu0 0.0
    %98 = vmatpush1.msra.mxu0 0.0
    %99 = vmatprep.subr.mxu0 0.0
    %100 = vmatpush1.msra.mxu0 0.0
    %101 = vmatprep.subr.mxu0 0.0
    %102 = vmatpush1.msra.mxu0 0.0
    %103 = vmatprep.subr.mxu0 0.0
    %104 = vmatpush1.msra.mxu0 0.0
    %105 = vmatprep.subr.mxu0 0.0
    %106 = vmatpush1.msra.mxu0 0.0
    %107 = vmatprep.subr.mxu0 0.0
    %108 = vmatpush1.msra.mxu0 0.0
    %109 = vmatprep.subr.mxu0 0.0
    %110 = vmatpush1.msra.mxu0 0.0
    %111 = vmatprep.subr.mxu0 0.0
    %112 = vmatpush1.msra.mxu0 0.0
    %113 = vmatprep.subr.mxu0 0.0
    %114 = vmatpush1.msra.mxu0 0.0
    %115 = vmatprep.subr.mxu0 0.0
    %116 = vmatpush1.msra.mxu0 0.0
    %117 = vmatprep.subr.mxu0 0.0
    %118 = vmatpush1.msra.mxu0 0.0
    %119 = vmatprep.subr.mxu0 0.0
    %120 = vmatpush1.msra.mxu0 0.0
    %121 = vmatprep.subr.mxu0 0.0
    %122 = vmatpush1.msra.mxu0 0.0
    %123 = vmatprep.subr.mxu0 0.0
    %124 = vmatpush1.msra.mxu0 0.0
    %125 = vmatprep.mubr.f32.mxu0 0.0
    %126 = vmatmul.mubr.f32.gmra.mrb[0].mxu0 %v44
    %v127 = vpop.f32.mrb[0].mxu0
    %v128 = vadd.f32 0.0, %v127
    %v129 = vpop.f32.mrb[0].mxu0
    %130 = vdwg.mxu0
    %v131 = vmul.f32 %v128, 0.03125
    %v132 = vsub.f32 %v44, %v131
    %v133 = vmul.f32 %v132, %v132
    %134 = vmatprep.subr.mxu0 0.0
    %135 = vmatpush1.msra.mxu0 %v45
    %136 = vmatprep.subr.mxu0 0.0
    %137 = vmatpush1.msra.mxu0 %v46
    %138 = vmatprep.subr.mxu0 0.0
    %139 = vmatpush1.msra.mxu0 %v47
    %140 = vmatprep.subr.mxu0 0.0
    %141 = vmatpush1.msra.mxu0 %v48
    %142 = vmatprep.subr.mxu0 0.0
    %143 = vmatpush1.msra.mxu0 %v49
    %144 = vmatprep.subr.mxu0 0.0
    %145 = vmatpush1.msra.mxu0 %v50
    %146 = vmatprep.subr.mxu0 0.0
    %147 = vmatpush1.msra.mxu0 %v51
    %148 = vmatprep.subr.mxu0 0.0
    %149 = vmatpush1.msra.mxu0 %v52
    %150 = vmatprep.subr.mxu0 0.0
    %151 = vmatpush1.msra.mxu0 %v53
    %152 = vmatprep.subr.mxu0 0.0
    %153 = vmatpush1.msra.mxu0 %v54
    %154 = vmatprep.subr.mxu0 0.0
    %155 = vmatpush1.msra.mxu0 %v55
    %156 = vmatprep.subr.mxu0 0.0
    %157 = vmatpush1.msra.mxu0 %v56
    %158 = vmatprep.subr.mxu0 0.0
    %159 = vmatpush1.msra.mxu0 %v57
    %160 = vmatprep.subr.mxu0 0.0
    %161 = vmatpush1.msra.mxu0 %v58
    %162 = vmatprep.subr.mxu0 0.0
    %163 = vmatpush1.msra.mxu0 %v59
    %164 = vmatprep.subr.mxu0 0.0
    %165 = vmatpush1.msra.mxu0 %v60
    %166 = vmatprep.subr.mxu0 0.0
    %167 = vmatpush1.msra.mxu0 0.0
    %168 = vmatprep.subr.mxu0 0.0
    %169 = vmatpush1.msra.mxu0 0.0
    %170 = vmatprep.subr.mxu0 0.0
    %171 = vmatpush1.msra.mxu0 0.0
    %172 = vmatprep.subr.mxu0 0.0
    %173 = vmatpush1.msra.mxu0 0.0
    %174 = vmatprep.subr.mxu0 0.0
    %175 = vmatpush1.msra.mxu0 0.0
    %176 = vmatprep.subr.mxu0 0.0
    %177 = vmatpush1.msra.mxu0 0.0
    %178 = vmatprep.subr.mxu0 0.0
    %179 = vmatpush1.msra.mxu0 0.0
    %180 = vmatprep.subr.mxu0 0.0
    %181 = vmatpush1.msra.mxu0 0.0
    %182 = vmatprep.subr.mxu0 0.0
    %183 = vmatpush1.msra.mxu0 0.0
    %184 = vmatprep.subr.mxu0 0.0
    %185 = vmatpush1.msra.mxu0 0.0
    %186 = vmatprep.subr.mxu0 0.0
    %187 = vmatpush1.msra.mxu0 0.0
    %188 = vmatprep.subr.mxu0 0.0
    %189 = vmatpush1.msra.mxu0 0.0
    %190 = vmatprep.subr.mxu0 0.0
    %191 = vmatpush1.msra.mxu0 0.0
    %192 = vmatprep.subr.mxu0 0.0
    %193 = vmatpush1.msra.mxu0 0.0
    %194 = vmatprep.subr.mxu0 0.0
    %195 = vmatpush1.msra.mxu0 0.0
    %196 = vmatprep.subr.mxu0 0.0
    %197 = vmatpush1.msra.mxu0 0.0
    %198 = vmatprep.mubr.f32.mxu0 0.0
    %199 = vmatmul.mubr.f32.gmra.mrb[0].mxu0 %v133
    %v200 = vpop.f32.mrb[0].mxu0
    %v201 = vadd.f32 0.0, %v200
    %v202 = vpop.f32.mrb[0].mxu0
    %203 = vdwg.mxu0
    %v204 = vmul.f32 %v201, 0.032258064
    %v205 = vmax.f32 %v204, 0.0
    %v206 = vrsqrt.pop %v205
    %v207 = vmul.f32 %v205, %v206
    %vm208 = vcmp.eq.f32.partialorder %v205, inf
    %v209 = vsel %vm208, %v205, %v207
    %vm210 = vcmp.eq.f32.partialorder %v205, 0.0
    %v211 = vand.u32 %v205, 2147483648
    %v212 = vsel %vm210, %v211, %v209
    %v213 = vadd.f32 %v212, 1e-06
    %v214 = vrcp.pop %v213
    %v215 = vmul.f32 %v213, %v214
    %v216 = vsub.f32 2.0, %v215
    %v217 = vmul.f32 %v214, %v216
    %v218 = vld [vmem:[%s1] sm:$0x1]
    %v219 = vmul.f32 %v132, %v217
    %v221 = vlaneseq
    %v222 = vshrl.u32 %v221, 7
    %v223 = vsub.s32 0, %v222
    %v224 = vrot.slane %v218, %v223
    %v226 = vmul.f32 %v224, %v219
    %v227 = vld [vmem:[%s2] sm:$0x1]
    %v229 = vlaneseq
    %v230 = vshrl.u32 %v229, 7
    %v231 = vsub.s32 0, %v230
    %v232 = vrot.slane %v227, %v231
    %v234 = vadd.f32 %v226, %v232
    %235 = vst [vmem:[#allocation7] sm:$0xf] %v234
    // Predicated region
    $region26: #{tpu_custom_call.1} parent=1 // pred_check
      _
    $region27: #{tpu_custom_call.1} parent=1 // pred_check_branch
      %237 = sbr.rel (0) target = $region29
    $region28: #{tpu_custom_call.1} parent=1 // pred_region
      %s239 = ssub.s32 64, 64
      %240 = vsyncadd [#allocation4], %s239
      %s242 = sshll.u32 [#allocation7], 4
      %s243 = int_to_ptr.vmem [resolvable:$true] %s242
      %245 = dma.vmem_to_hbm [thread:$0]  %s243, 64, %s4, [#allocation4]
    $region29: #{tpu_custom_call.1} parent=1 // pred_fallthru
      _
    // Predicated region
    $region30: #{tpu_custom_call.1} parent=1 // pred_check
      _
    $region31: #{tpu_custom_call.1} parent=1 // pred_check_branch
      %247 = sbr.rel (0) target = $region33
    $region32: #{tpu_custom_call.1} parent=1 // pred_region
      %248 = dma.done [#allocation4], 64
    $region33: #{tpu_custom_call.1} parent=1 // pred_fallthru
      _
    %249 = vsyncpa [#allocation3], 1
    %250 = vsyncpa [#allocation6], 1
    %251 = vsyncpa [#allocation4], 1

</llo_original>
